<compile_context>
chip_gen: v5e
topology: v5e:2x2
jax: 0.10.0
libtpu: 0.0.40
codegen_flags: <defaults>
</compile_context>

<pallas_src>
import jax
import jax.numpy as jnp
from jax.experimental import pallas as pl
from jax.experimental.pallas import tpu as pltpu

LANES = 128
SUBLANES = 8


def _round_up(x, m):
    return ((x + m - 1) // m) * m


def make_policy_kernel(num_actions):
    def policy_kernel(x_ref, w1_ref, b1_ref, w2_ref, b2_ref, out_ref):
        # fc: Linear(obs, 64) + ReLU   (f32 accumulation on the MXU)
        h = jnp.dot(x_ref[...], w1_ref[...], preferred_element_type=jnp.float32)
        h = jnp.maximum(h + b1_ref[...], 0.0)                       # (tile, 64)
        # action_head against lane-dense (64, 128) padded W2; padded columns
        # have bias -1e30 so they never win the row max and exp underflows to 0.
        logits = jnp.dot(h, w2_ref[...], preferred_element_type=jnp.float32)
        logits = logits + b2_ref[...]                                # (tile, 128)
        # numerically stable softmax over the (padded) last dim
        m = jnp.max(logits, axis=-1, keepdims=True)
        e = jnp.exp(logits - m)
        denom = jnp.sum(e, axis=-1, keepdims=True)
        probs = e / denom          # exact divide: rows sum to 1 to f32 precision
        # store only the real action columns (narrow masked vst, no padded HBM traffic)
        out_ref[...] = probs[:, :num_actions]

    return policy_kernel


def prepare_action_head(w2, b2):
    """Pad action_head to 128 lanes ONCE (hoisted out of the per-call hot path)."""
    hidden, a = w2.shape
    a_pad = _round_up(max(a, 1), LANES)
    w2p = jnp.zeros((hidden, a_pad), jnp.float32).at[:, :a].set(w2.astype(jnp.float32))
    b2p = (jnp.full((1, a_pad), -1e30, jnp.float32)
           .at[:, :a].set(b2.reshape(1, a).astype(jnp.float32)))
    return w2p, b2p, a


def policy_forward(x, w1, b1, w2p, b2p, num_actions, *, tile_b=2048):
    """x: (B, obs) f32; w1: (obs, H) f32; b1: (1, H); w2p: (H, 128k); b2p: (1, 128k)."""
    B, obs = x.shape
    hidden = w1.shape[1]
    a_pad = w2p.shape[1]
    b1 = b1.reshape(1, hidden)

    # Batch tile: large enough to amortize ~0.35us per-grid-step overhead,
    # clamped so the grid keeps >= ~16 steps on moderate B (2 TCs on v7x each
    # need several steps for double-buffered prefetch).  Multiple of 8 sublanes.
    tile = min(tile_b, max(SUBLANES, _round_up(pl.cdiv(B, 16), SUBLANES)))
    grid = (pl.cdiv(B, tile),)  # ragged tail handled by Pallas OOB read/masked write

    out = pl.pallas_call(
        make_policy_kernel(num_actions),
        out_shape=jax.ShapeDtypeStruct((B, num_actions), jnp.float32),
        grid=grid,
        in_specs=[
            pl.BlockSpec((tile, obs), lambda i: (i, 0)),        # x: tiled over batch
            pl.BlockSpec((obs, hidden), lambda i: (0, 0)),      # W1: VMEM-resident
            pl.BlockSpec((1, hidden), lambda i: (0, 0)),        # b1: resident
            pl.BlockSpec((hidden, a_pad), lambda i: (0, 0)),    # W2 (padded): resident
            pl.BlockSpec((1, a_pad), lambda i: (0, 0)),         # b2 (padded): resident
        ],
        out_specs=pl.BlockSpec((tile, num_actions), lambda i: (i, 0)),
        compiler_params=pltpu.CompilerParams(
            dimension_semantics=("parallel",),
        ),
    )(x, w1, b1, w2p, b2p)

    return out


def init_params(key, obs_space, action_space, hidden=64):
    # Deterministic synthetic init (PyTorch-style uniform fan-in bounds).
    k1, k2, k3, k4 = jax.random.split(key, 4)
    bound1 = 1.0 / jnp.sqrt(obs_space)
    bound2 = 1.0 / jnp.sqrt(hidden)
    # Stored transposed relative to PyTorch's [out, in] layout.
    w1 = jax.random.uniform(k1, (obs_space, hidden), jnp.float32, -bound1, bound1)
    b1 = jax.random.uniform(k2, (1, hidden), jnp.float32, -bound1, bound1)
    w2 = jax.random.uniform(k3, (hidden, action_space), jnp.float32, -bound2, bound2)
    b2 = jax.random.uniform(k4, (1, action_space), jnp.float32, -bound2, bound2)
    return w1, b1, w2, b2


def _reference(x, w1, b1, w2, b2):
    h = jnp.maximum(x @ w1 + b1, 0.0)
    return jax.nn.softmax(h @ w2 + b2, axis=-1)


if __name__ == "__main__":
    obs_space = 16      # small observation dim
    action_space = 4    # small discrete action space
    batch = 8

    key = jax.random.PRNGKey(0)
    kx, kp, kx2 = jax.random.split(key, 3)
    x = jax.random.normal(kx, (batch, obs_space), jnp.float32)
    w1, b1, w2, b2 = init_params(kp, obs_space, action_space)
    w2p, b2p, num_actions = prepare_action_head(w2, b2)   # padded once, reused

    probs = policy_forward(x, w1, b1, w2p, b2p, num_actions)
    probs = jax.block_until_ready(probs)

    probs_ref = _reference(x, w1, b1, w2, b2)
    assert probs.shape == (batch, action_space)
    assert jnp.allclose(probs, probs_ref, atol=1e-5, rtol=1e-5), "mismatch vs reference"
    assert jnp.allclose(jnp.sum(probs, axis=-1), 1.0, atol=1e-5)

    # Ragged-batch path: B not a multiple of the tile — last block reads past
    # the end (row-local ops only) and the out-of-bounds writes are masked.
    batch2 = 13
    x2 = jax.random.normal(kx2, (batch2, obs_space), jnp.float32)
    probs2 = jax.block_until_ready(
        policy_forward(x2, w1, b1, w2p, b2p, num_actions))
    probs2_ref = _reference(x2, w1, b1, w2, b2)
    assert probs2.shape == (batch2, action_space)
    assert jnp.allclose(probs2, probs2_ref, atol=1e-5, rtol=1e-5), "ragged mismatch"
    assert jnp.allclose(jnp.sum(probs2, axis=-1), 1.0, atol=1e-5)

    print("KERNEL_OK")
</pallas_src>

<mosaic_0001>
module attributes {stable_mosaic.version = 11 : i64} {
  func.func @policy_kernel(%arg0: i32, %arg1: memref<8x16xf32, #tpu.memory_space<vmem>>, %arg2: memref<16x64xf32, #tpu.memory_space<vmem>>, %arg3: memref<1x64xf32, #tpu.memory_space<vmem>>, %arg4: memref<64x128xf32, #tpu.memory_space<vmem>>, %arg5: memref<1x128xf32, #tpu.memory_space<vmem>>, %arg6: memref<8x4xf32, #tpu.memory_space<vmem>>) attributes {dimension_semantics = [#tpu.dimension_semantics<parallel>], iteration_bounds = array<i64: 1>, scalar_prefetch = 0 : i64, scratch_operands = 0 : i64, tpu.core_type = #tpu.core_type<tc>, window_params = [{transform_indices = @transform_0, window_bounds = array<i64: 8, 16>}, {pipeline_mode = #tpu.pipeline_mode<synchronous>, transform_indices = @transform_1, window_bounds = array<i64: 16, 64>}, {pipeline_mode = #tpu.pipeline_mode<synchronous>, transform_indices = @transform_2, window_bounds = array<i64: 1, 64>}, {pipeline_mode = #tpu.pipeline_mode<synchronous>, transform_indices = @transform_3, window_bounds = array<i64: 64, 128>}, {pipeline_mode = #tpu.pipeline_mode<synchronous>, transform_indices = @transform_4, window_bounds = array<i64: 1, 128>}, {transform_indices = @transform_5, window_bounds = array<i64: 8, 4>}]} {
    %c0 = arith.constant 0 : index
    %c0_0 = arith.constant 0 : index
    %0 = vector.load %arg1[%c0, %c0_0] : memref<8x16xf32, #tpu.memory_space<vmem>>, vector<8x16xf32>
    %c0_1 = arith.constant 0 : index
    %c0_2 = arith.constant 0 : index
    %1 = vector.load %arg2[%c0_1, %c0_2] : memref<16x64xf32, #tpu.memory_space<vmem>>, vector<16x64xf32>
    %cst = arith.constant dense<0.000000e+00> : vector<8x64xf32>
    %2 = tpu.matmul %0, %1, %cst {dimension_numbers = #tpu.dot_dimension_numbers<[1], [0], [0], [1], [0, 0, 1, 1], [], []>} : vector<8x16xf32>, vector<16x64xf32>, vector<8x64xf32> -> vector<8x64xf32>
    %c0_3 = arith.constant 0 : index
    %c0_4 = arith.constant 0 : index
    %3 = vector.load %arg3[%c0_3, %c0_4] : memref<1x64xf32, #tpu.memory_space<vmem>>, vector<1x64xf32>
    %4 = vector.broadcast %3 : vector<1x64xf32> to vector<8x64xf32>
    %5 = arith.addf %2, %4 : vector<8x64xf32>
    %cst_5 = arith.constant 0.000000e+00 : f32
    %6 = vector.broadcast %cst_5 : f32 to vector<8x64xf32>
    %7 = arith.maximumf %5, %6 : vector<8x64xf32>
    %c0_6 = arith.constant 0 : index
    %c0_7 = arith.constant 0 : index
    %8 = vector.load %arg4[%c0_6, %c0_7] : memref<64x128xf32, #tpu.memory_space<vmem>>, vector<64x128xf32>
    %cst_8 = arith.constant dense<0.000000e+00> : vector<8x128xf32>
    %9 = tpu.matmul %7, %8, %cst_8 {dimension_numbers = #tpu.dot_dimension_numbers<[1], [0], [0], [1], [0, 0, 1, 1], [], []>} : vector<8x64xf32>, vector<64x128xf32>, vector<8x128xf32> -> vector<8x128xf32>
    %c0_9 = arith.constant 0 : index
    %c0_10 = arith.constant 0 : index
    %10 = vector.load %arg5[%c0_9, %c0_10] : memref<1x128xf32, #tpu.memory_space<vmem>>, vector<1x128xf32>
    %11 = vector.broadcast %10 : vector<1x128xf32> to vector<8x128xf32>
    %12 = arith.addf %9, %11 : vector<8x128xf32>
    %cst_11 = arith.constant dense<0xFF800000> : vector<8xf32>
    %13 = vector.multi_reduction <maximumf>, %12, %cst_11 [1] : vector<8x128xf32> to vector<8xf32>
    %14 = vector.shape_cast %13 : vector<8xf32> to vector<8x1xf32>
    %15 = vector.broadcast %14 : vector<8x1xf32> to vector<8x128xf32>
    %16 = arith.subf %12, %15 : vector<8x128xf32>
    %17 = math.exp %16 : vector<8x128xf32>
    %cst_12 = arith.constant dense<0.000000e+00> : vector<8xf32>
    %18 = vector.multi_reduction <add>, %17, %cst_12 [1] : vector<8x128xf32> to vector<8xf32>
    %19 = vector.shape_cast %18 : vector<8xf32> to vector<8x1xf32>
    %20 = vector.broadcast %19 : vector<8x1xf32> to vector<8x128xf32>
    %21 = arith.divf %17, %20 : vector<8x128xf32>
    %22 = vector.extract_strided_slice %21 {offsets = [0, 0], sizes = [8, 4], strides = [1, 1]} : vector<8x128xf32> to vector<8x4xf32>
    %c0_13 = arith.constant 0 : index
    %c0_14 = arith.constant 0 : index
    %23 = vector.load %arg6[%c0_13, %c0_14] : memref<8x4xf32, #tpu.memory_space<vmem>>, vector<8x4xf32>
    tpu.vector_store %arg6[%c0_13, %c0_14], %22 {strides = array<i32>} : memref<8x4xf32, #tpu.memory_space<vmem>>, vector<8x4xf32>,
    return
  }
  func.func @transform_0(%arg0: i32) -> (i32, i32) {
    %c0_i32 = arith.constant 0 : i32
    %c0_i32_0 = arith.constant 0 : i32
    return %arg0, %c0_i32 : i32, i32
  }
  func.func @transform_1(%arg0: i32) -> (i32, i32) {
    %c0_i32 = arith.constant 0 : i32
    %c0_i32_0 = arith.constant 0 : i32
    %c0_i32_1 = arith.constant 0 : i32
    return %c0_i32, %c0_i32_0 : i32, i32
  }
  func.func @transform_2(%arg0: i32) -> (i32, i32) {
    %c0_i32 = arith.constant 0 : i32
    %c0_i32_0 = arith.constant 0 : i32
    %c0_i32_1 = arith.constant 0 : i32
    return %c0_i32, %c0_i32_0 : i32, i32
  }
  func.func @transform_3(%arg0: i32) -> (i32, i32) {
    %c0_i32 = arith.constant 0 : i32
    %c0_i32_0 = arith.constant 0 : i32
    %c0_i32_1 = arith.constant 0 : i32
    return %c0_i32, %c0_i32_0 : i32, i32
  }
  func.func @transform_4(%arg0: i32) -> (i32, i32) {
    %c0_i32 = arith.constant 0 : i32
    %c0_i32_0 = arith.constant 0 : i32
    %c0_i32_1 = arith.constant 0 : i32
    return %c0_i32, %c0_i32_0 : i32, i32
  }
  func.func @transform_5(%arg0: i32) -> (i32, i32) {
    %c0_i32 = arith.constant 0 : i32
    %c0_i32_0 = arith.constant 0 : i32
    return %arg0, %c0_i32 : i32, i32
  }
}

</mosaic_0001>

<llo_original>
// kernel: tpu_custom_call.1
$region0: #{tpu_custom_call.1}
  #allocation0 [shape = 'u32[]', space=smem, size = 0x4, offset = 0x4, fixed_abs, tag = 'smem constant byte address 0x4 - core index']
  #allocation1 [shape = 'u32[72,128]{1,0:T(1,128)}', space=vmem, size = 0x9000, scoped, tag = 'internal scratch']
  %s0 = inlined_call_operand.hbm [shape: f32[8,16], index: 0, kind: input, shape index: {}]
  %s1 = inlined_call_operand.hbm [shape: f32[16,64], index: 1, kind: input, shape index: {}]
  %s2 = inlined_call_operand.vmem [shape: f32[1,64], index: 2, kind: input, shape index: {}]
  %s3 = inlined_call_operand.hbm [shape: f32[64,128], index: 3, kind: input, shape index: {}]
  %s4 = inlined_call_operand.vmem [shape: f32[1,128], index: 4, kind: input, shape index: {}]
  %s5 = inlined_call_operand.vmem [shape: f32[8,4], index: 5, kind: output, shape index: {}]
  %s6 = sld [smem:[#allocation0]]
  $region42: #{tpu_custom_call.1} parent=0
    _
  %s8 = ssub.s32 1, %s6
  %s9 = scalar_select 0, %s8, %s6
  $region1: #{tpu_custom_call.1} parent=0
    #allocation2 [shape = 'u8[4096]{0}', space=vmem, size = 0x1000, scoped, tag = 'input window, operand 0, single buffered']
    #allocation3 [shape = 's32[1]{0}', space=sflag, size = 0x4, scoped, tag = 'scoped memory for tpu_custom_call.1']
    #allocation4 [shape = 'u8[8192]{0}', space=vmem, size = 0x2000, scoped, tag = 'input window, operand 1, single buffered']
    #allocation5 [shape = 's32[1]{0}', space=sflag, size = 0x4, scoped, tag = 'scoped memory for tpu_custom_call.1']
    #allocation6 [shape = 'u8[32768]{0}', space=vmem, size = 0x8000, scoped, tag = 'input window, operand 3, single buffered']
    %10 = vsyncpa [#allocation3], 0
    %11 = vsyncpa [#allocation5], 0
    // Predicated region
    $region2: #{tpu_custom_call.1} parent=1 // pred_check
      _
    $region3: #{tpu_custom_call.1} parent=1 // pred_check_branch
      %13 = sbr.rel (0) target = $region5
    $region4: #{tpu_custom_call.1} parent=1 // pred_region
      %15 = vsyncadd [#allocation3], 0
      %s17 = sshll.u32 %s0, 4
      %s18 = int_to_ptr.hbm [resolvable:$true] %s17
      %s19 = sshll.u32 [#allocation2], 4
      %s20 = int_to_ptr.vmem [resolvable:$true] %s19
      %22 = dma.hbm_to_vmem [thread:$0]  %s18, 128, %s20, [#allocation3]
    $region5: #{tpu_custom_call.1} parent=1 // pred_fallthru
      _
    // Predicated region
    $region6: #{tpu_custom_call.1} parent=1 // pred_check
      _
    $region7: #{tpu_custom_call.1} parent=1 // pred_check_branch
      %24 = sbr.rel (0) target = $region9
    $region8: #{tpu_custom_call.1} parent=1 // pred_region
      %26 = vsyncadd [#allocation5], 0
      %s27 = sshll.u32 %s1, 4
      %s28 = int_to_ptr.hbm [resolvable:$true] %s27
      %s29 = sshll.u32 [#allocation4], 4
      %s30 = int_to_ptr.vmem [resolvable:$true] %s29
      %35 = dma.hbm_to_vmem [thread:$0]  %s28, 256, %s30, [#allocation5], 128, 128, 8
    $region9: #{tpu_custom_call.1} parent=1 // pred_fallthru
      _
    // Predicated region
    $region10: #{tpu_custom_call.1} parent=1 // pred_check
      _
    $region11: #{tpu_custom_call.1} parent=1 // pred_check_branch
      %37 = sbr.rel (0) target = $region13
    $region12: #{tpu_custom_call.1} parent=1 // pred_region
      _
    $region13: #{tpu_custom_call.1} parent=1 // pred_fallthru
      _
    // Predicated region
    $region14: #{tpu_custom_call.1} parent=1 // pred_check
      _
    $region15: #{tpu_custom_call.1} parent=1 // pred_check_branch
      %39 = sbr.rel (0) target = $region17
    $region16: #{tpu_custom_call.1} parent=1 // pred_region
      %41 = vsyncadd [#allocation5], 0
      %s42 = sshll.u32 %s3, 4
      %s43 = int_to_ptr.hbm [resolvable:$true] %s42
      %s44 = sshll.u32 [#allocation6], 4
      %s45 = int_to_ptr.vmem [resolvable:$true] %s44
      %50 = dma.hbm_to_vmem [thread:$0]  %s43, 1024, %s45, [#allocation5], 128, 128, 8
    $region17: #{tpu_custom_call.1} parent=1 // pred_fallthru
      _
    // Predicated region
    $region18: #{tpu_custom_call.1} parent=1 // pred_check
      _
    $region19: #{tpu_custom_call.1} parent=1 // pred_check_branch
      %52 = sbr.rel (0) target = $region21
    $region20: #{tpu_custom_call.1} parent=1 // pred_region
      _
    $region21: #{tpu_custom_call.1} parent=1 // pred_fallthru
      _
    // Predicated region
    $region22: #{tpu_custom_call.1} parent=1 // pred_check
      _
    $region23: #{tpu_custom_call.1} parent=1 // pred_check_branch
      %54 = sbr.rel (0) target = $region25
    $region24: #{tpu_custom_call.1} parent=1 // pred_region
      %56 = dma.done [#allocation3], 128
    $region25: #{tpu_custom_call.1} parent=1 // pred_fallthru
      _
    // Predicated region
    $region26: #{tpu_custom_call.1} parent=1 // pred_check
      _
    $region27: #{tpu_custom_call.1} parent=1 // pred_check_branch
      %58 = sbr.rel (0) target = $region29
    $region28: #{tpu_custom_call.1} parent=1 // pred_region
      %60 = dma.done [#allocation5], 256
    $region29: #{tpu_custom_call.1} parent=1 // pred_fallthru
      _
    // Predicated region
    $region30: #{tpu_custom_call.1} parent=1 // pred_check
      _
    $region31: #{tpu_custom_call.1} parent=1 // pred_check_branch
      %62 = sbr.rel (0) target = $region33
    $region32: #{tpu_custom_call.1} parent=1 // pred_region
      %64 = dma.done [#allocation5], 1024
    $region33: #{tpu_custom_call.1} parent=1 // pred_fallthru
      _
    %v65 = vld [vmem:[#allocation2] sm:$0xff]
    %v66 = vld [vmem:[#allocation4] sm:$0xff]
    %v67 = vld [vmem:[#allocation4 + $0x8] sm:$0xff]
    %v68 = vld [vmem:[%s2] sm:$0x1]
    %v70 = vperm.slane %v68, 0
    %vm72 = vcmask 130048
    %v74 = vsel %vm72, %v65, 0
    %76 = vmatpush.msra.mxu0 0.0
    %77 = vmatpush.msra.mxu0 0.0
    %78 = vmatpush.msra.mxu0 0.0
    %79 = vmatpush.msra.mxu0 0.0
    %80 = vmatpush.msra.mxu0 0.0
    %81 = vmatpush.msra.mxu0 0.0
    %82 = vmatpush.msra.mxu0 0.0
    %83 = vmatpush.msra.mxu0 0.0
    %84 = vmatpush.msra.mxu0 0.0
    %85 = vmatpush.msra.mxu0 0.0
    %86 = vmatpush.msra.mxu0 0.0
    %87 = vmatpush.msra.mxu0 0.0
    %88 = vmatpush.msra.mxu0 0.0
    %89 = vmatpush.msra.mxu0 0.0
    %90 = vmatpush.msra.mxu0 %v67
    %91 = vmatpush.msra.mxu0 %v66
    %92 = vmatmul.f32.gmra.mxu0 %v74
    %v93 = vpop.f32.mrf.mxu0
    %v94 = vadd.f32 %v70, %v93
    %95 = vdwg.mxu0
    %v96 = vmax.f32 %v94, 0.0
    %v97 = vld [vmem:[#allocation6] sm:$0xff]
    %v98 = vld [vmem:[#allocation6 + $0x8] sm:$0xff]
    %v99 = vld [vmem:[#allocation6 + $0x10] sm:$0xff]
    %v100 = vld [vmem:[#allocation6 + $0x18] sm:$0xff]
    %v101 = vld [vmem:[#allocation6 + $0x20] sm:$0xff]
    %v102 = vld [vmem:[#allocation6 + $0x28] sm:$0xff]
    %v103 = vld [vmem:[#allocation6 + $0x30] sm:$0xff]
    %v104 = vld [vmem:[#allocation6 + $0x38] sm:$0xff]
    %v105 = vld [vmem:[%s4] sm:$0x1]
    %v107 = vperm.slane %v105, 0
    %vm109 = vcmask 523264
    %v111 = vsel %vm109, %v96, 0
    %113 = vmatpush.msra.mxu0 0.0
    %114 = vmatpush.msra.mxu0 0.0
    %115 = vmatpush.msra.mxu0 0.0
    %116 = vmatpush.msra.mxu0 0.0
    %117 = vmatpush.msra.mxu0 0.0
    %118 = vmatpush.msra.mxu0 0.0
    %119 = vmatpush.msra.mxu0 0.0
    %120 = vmatpush.msra.mxu0 0.0
    %121 = vmatpush.msra.mxu0 %v104
    %122 = vmatpush.msra.mxu0 %v103
    %123 = vmatpush.msra.mxu0 %v102
    %124 = vmatpush.msra.mxu0 %v101
    %125 = vmatpush.msra.mxu0 %v100
    %126 = vmatpush.msra.mxu0 %v99
    %127 = vmatpush.msra.mxu0 %v98
    %128 = vmatpush.msra.mxu0 %v97
    %129 = vmatmul.f32.gmra.mxu0 %v111
    %v130 = vpop.f32.mrf.mxu0
    %v131 = vadd.f32 %v107, %v130
    %132 = vdwg.mxu0
    %133 = vmax.xlane.f32.xlu0 %v131
    %v134 = vpop.xlane.xlu0 %133
    %v135 = vsub.f32 %v131, %v134
    %v136 = vmul.f32 %v135, 1.442695
    %v137 = vpow.pop %v136
    %138 = vadd.xlane.f32.xlu0 %v137
    %v139 = vpop.xlane.xlu0 %138
    %v140 = vrcp.pop %v139
    %v141 = vmul.f32 %v139, %v140
    %v142 = vsub.f32 1.0, %v141
    %v143 = vmul.f32 %v140, %v142
    %v144 = vadd.f32 %v140, %v143
    %vm145 = vweird.f32 %v139
    %vm146 = vweird.f32 %v140
    %vm147 = vmor %vm145, %vm146
    %v148 = vsel %vm147, %v140, %v144
    %v149 = vand.u32 2147483647, %v139
    %vm150 = vcmp.eq.f32.partialorder %v149, 8.507059e+37
    %v151 = vand.u32 %v139, 2147483648
    %v152 = vor.u32 1.1754944e-38, %v151
    %v153 = vsel %vm150, %v152, %v148
    %v154 = vmul.f32 %v137, %v153
    %vm155 = vcmask 31744
    %156 = vst.msk [vmem:[%s5] sm:$0xff] %vm155, %v154
    // Predicated region
    $region34: #{tpu_custom_call.1} parent=1 // pred_check
      _
    $region35: #{tpu_custom_call.1} parent=1 // pred_check_branch
      %158 = sbr.rel (0) target = $region37
    $region36: #{tpu_custom_call.1} parent=1 // pred_region
      _
    $region37: #{tpu_custom_call.1} parent=1 // pred_fallthru
      _
    // Predicated region
    $region38: #{tpu_custom_call.1} parent=1 // pred_check
      _
    $region39: #{tpu_custom_call.1} parent=1 // pred_check_branch
      %160 = sbr.rel (0) target = $region41
    $region40: #{tpu_custom_call.1} parent=1 // pred_region
      _
    $region41: #{tpu_custom_call.1} parent=1 // pred_fallthru
      _
    %161 = vsyncpa [#allocation3], 1
    %162 = vsyncpa [#allocation5], 1

</llo_original>
